<compile_context>
chip_gen: v7x
topology: tpu7x:2x2x1
jax: 0.10.0
libtpu: 0.0.40
codegen_flags: <defaults>
</compile_context>

<pallas_src>
import functools

import numpy as np
import jax
import jax.numpy as jnp
from jax.experimental import pallas as pl
from jax.experimental.pallas import tpu as pltpu


def _round_up(x, m):
    return ((x + m - 1) // m) * m


def _loss_tile_kernel(thr_ref, frow_ref, fcol_ref, trow_ref, tcol_ref,
                      erow_ref, ecol_ref, irow_ref, icol_ref,
                      o_ref, acc_ref, *, margin):
    # thr_ref : SMEM (2,)      [median(time_diff), quantile_0.75(time_diff)]
    # frow_ref: VMEM (tm, D)   normalized feature rows for this row tile
    # fcol_ref: VMEM (tn, D)   normalized feature rows for this col tile
    # trow/tcol, erow/ecol, irow/icol: (tm,1) / (1,tn) survival-time, event,
    #                                  global-row-index vectors
    # o_ref   : SMEM (1,)      scalar loss
    # acc_ref : SMEM (4,)      [sim_sum, sim_cnt, dis_sum, dis_cnt] accumulators
    i = pl.program_id(0)
    j = pl.program_id(1)

    @pl.when((i == 0) & (j == 0))
    def _init():
        acc_ref[0] = jnp.float32(0.0)
        acc_ref[1] = jnp.float32(0.0)
        acc_ref[2] = jnp.float32(0.0)
        acc_ref[3] = jnp.float32(0.0)

    # Pairwise Euclidean distances between unit-norm rows via one MXU gram
    # matmul per tile:  d2 = ||a||^2 + ||b||^2 - 2 a.b = 2 - 2 a.b.
    gram = jax.lax.dot_general(
        frow_ref[...], fcol_ref[...], (((1,), (1,)), ((), ())),
        preferred_element_type=jnp.float32)                      # (tm, tn)
    d2 = jnp.maximum(2.0 - 2.0 * gram, 0.0)
    dist = jnp.sqrt(d2)

    # Time-difference tile from (tm,1)/(1,tn) broadcasts (no transposes).
    td = jnp.abs(trow_ref[...] - tcol_ref[...])                  # (tm, tn)

    # Boolean event mask instead of a BxB f32 outer product.
    ev = (erow_ref[...] > 0.0) & (ecol_ref[...] > 0.0)           # (tm, tn)

    # Diagonal exclusion for the similar term only (the dissimilar term never
    # includes the diagonal: time_diff_ii == 0 and q75_thr >= 0 with strict >).
    off_diag = irow_ref[...] != icol_ref[...]                    # (tm, tn)

    med = thr_ref[0]
    q75 = thr_ref[1]

    sim_f = ((td < med) & ev & off_diag).astype(jnp.float32)
    dis_f = (td > q75).astype(jnp.float32)
    hinge = jnp.maximum(margin - dist, 0.0)

    acc_ref[0] = acc_ref[0] + jnp.sum(dist * sim_f)
    acc_ref[1] = acc_ref[1] + jnp.sum(sim_f)
    acc_ref[2] = acc_ref[2] + jnp.sum(hinge * dis_f)
    acc_ref[3] = acc_ref[3] + jnp.sum(dis_f)

    @pl.when((i == pl.num_programs(0) - 1) & (j == pl.num_programs(1) - 1))
    def _finalize():
        sim_sum = acc_ref[0]
        sim_cnt = acc_ref[1]
        dis_sum = acc_ref[2]
        dis_cnt = acc_ref[3]
        sim_loss = jnp.where(sim_cnt > 0.0,
                             sim_sum / jnp.maximum(sim_cnt, 1.0), 0.0)
        dis_loss = jnp.where(dis_cnt > 0.0,
                             dis_sum / jnp.maximum(dis_cnt, 1.0), 0.0)
        o_ref[0] = sim_loss + dis_loss


def survival_contrastive_loss(features, survival_times, event_indicators,
                              margin=1.0, temperature=0.1,
                              compute_dtype=jnp.float32):
    # `temperature` is unused in the reference forward pass.
    del temperature
    B, D = features.shape
    f = features.astype(jnp.float32)
    t = survival_times.astype(jnp.float32)
    e = event_indicators.astype(jnp.float32)

    # ---- thresholds over the flattened B*B |t_i - t_j| matrix (exact order
    # statistics; selection via jnp.quantile instead of a manual full sort).
    td_flat = jnp.abs(t[None, :] - t[:, None]).reshape(-1)
    median_thr = jnp.quantile(td_flat, 0.5, method="lower")   # torch.median (lower)
    q75_thr = jnp.quantile(td_flat, 0.75)                     # torch.quantile linear
    thresholds = jnp.stack([median_thr, q75_thr]).astype(jnp.float32)

    # ---- L2 normalize rows in f32 (torch.nn.functional.normalize, eps=1e-12),
    # then optionally cast to a narrower matmul dtype (e.g. bf16 halves DMA).
    norm = jnp.sqrt(jnp.sum(f * f, axis=1, keepdims=True))
    fn = (f / jnp.maximum(norm, 1e-12)).astype(compute_dtype)
    # TODO(synk): d2 = 2 - 2*gram assumes unit rows; an all-zero feature row
    # (norm <= 1e-12) deviates from torch.cdist for pairs involving that row.

    # ---- pad batch to a lane-friendly multiple of 128; padded survival times
    # are NaN so strict </> comparisons drop every padded pair from both masks.
    B_pad = max(_round_up(B, 128), 128)
    tn = next(tsz for tsz in (512, 256, 128) if B_pad % tsz == 0)
    tm = next(tsz for tsz in (256, 128) if B_pad % tsz == 0)
    nr, nc = B_pad // tm, B_pad // tn
    pad = B_pad - B

    fn_p = jnp.pad(fn, ((0, pad), (0, 0)))
    t_p = jnp.pad(t, (0, pad), constant_values=jnp.nan)
    e_p = jnp.pad(e, (0, pad))
    idx = jnp.arange(B_pad, dtype=jnp.int32)

    kernel = functools.partial(_loss_tile_kernel, margin=float(margin))
    grid_spec = pltpu.PrefetchScalarGridSpec(
        num_scalar_prefetch=0,
        grid=(nr, nc),
        in_specs=[
            pl.BlockSpec(memory_space=pltpu.MemorySpace.SMEM),   # thresholds
            pl.BlockSpec((tm, D), lambda i, j: (i, 0)),          # row features
            pl.BlockSpec((tn, D), lambda i, j: (j, 0)),          # col features
            pl.BlockSpec((tm, 1), lambda i, j: (i, 0)),          # t rows
            pl.BlockSpec((1, tn), lambda i, j: (0, j)),          # t cols
            pl.BlockSpec((tm, 1), lambda i, j: (i, 0)),          # e rows
            pl.BlockSpec((1, tn), lambda i, j: (0, j)),          # e cols
            pl.BlockSpec((tm, 1), lambda i, j: (i, 0)),          # row indices
            pl.BlockSpec((1, tn), lambda i, j: (0, j)),          # col indices
        ],
        out_specs=pl.BlockSpec(memory_space=pltpu.MemorySpace.SMEM),
        scratch_shapes=[pltpu.SMEM((4,), jnp.float32)],
    )

    flops = 2 * B_pad * B_pad * D + 14 * B_pad * B_pad
    bytes_accessed = (fn_p.size * fn_p.dtype.itemsize * (nr + nc)
                      + 6 * B_pad * 4 + 12)

    out = pl.pallas_call(
        kernel,
        out_shape=jax.ShapeDtypeStruct((1,), jnp.float32),
        grid_spec=grid_spec,
        compiler_params=pltpu.CompilerParams(
            dimension_semantics=("arbitrary", "arbitrary")),
        cost_estimate=pl.CostEstimate(
            flops=flops, transcendentals=B_pad * B_pad,
            bytes_accessed=bytes_accessed),
    )(thresholds,
      fn_p, fn_p,
      t_p.reshape(B_pad, 1), t_p.reshape(1, B_pad),
      e_p.reshape(B_pad, 1), e_p.reshape(1, B_pad),
      idx.reshape(B_pad, 1), idx.reshape(1, B_pad))
    return out[0]


def _reference_loss(features, survival_times, event_indicators, margin=1.0):
    """Pure-JAX reference mirroring the PyTorch module (for validation)."""
    B = features.shape[0]
    fn = features / jnp.maximum(
        jnp.linalg.norm(features, axis=1, keepdims=True), 1e-12)
    dist = jnp.sqrt(jnp.maximum(
        jnp.sum((fn[:, None, :] - fn[None, :, :]) ** 2, axis=-1), 0.0))
    t = survival_times
    td = jnp.abs(t[None, :] - t[:, None])
    ev = event_indicators[None, :] * event_indicators[:, None]
    n = B * B
    td_sorted = jnp.sort(td.reshape(-1))
    median_thr = td_sorted[(n - 1) // 2]                       # torch.median (lower)
    pos = 0.75 * (n - 1)                                       # torch.quantile linear
    lo, hi = int(np.floor(pos)), int(np.ceil(pos))
    frac = float(pos - lo)
    q75_thr = td_sorted[lo] * (1 - frac) + td_sorted[hi] * frac
    eye = jnp.eye(B, dtype=bool)
    sim = (td < median_thr) & (ev > 0) & ~eye
    dis = (td > q75_thr) & ~eye
    sim_f = sim.astype(jnp.float32)
    dis_f = dis.astype(jnp.float32)
    sim_loss = jnp.where(sim_f.sum() > 0,
                         (dist * sim_f).sum() / jnp.maximum(sim_f.sum(), 1.0), 0.0)
    dis_loss = jnp.where(dis_f.sum() > 0,
                         (jnp.maximum(margin - dist, 0.0) * dis_f).sum()
                         / jnp.maximum(dis_f.sum(), 1.0), 0.0)
    return sim_loss + dis_loss


if __name__ == "__main__":
    key = jax.random.PRNGKey(0)
    k1, k2, k3 = jax.random.split(key, 3)

    B, D = 8, 32
    features = jax.random.normal(k1, (B, D), dtype=jnp.float32)
    survival_times = jax.random.uniform(k2, (B,), dtype=jnp.float32,
                                        minval=0.1, maxval=10.0)
    event_indicators = (jax.random.uniform(k3, (B,)) > 0.3).astype(jnp.float32)

    loss = survival_contrastive_loss(features, survival_times, event_indicators,
                                     margin=1.0, temperature=0.1)
    loss = jax.block_until_ready(loss)

    ref = _reference_loss(features, survival_times, event_indicators, margin=1.0)
    ref = jax.block_until_ready(ref)
    assert np.allclose(np.asarray(loss), np.asarray(ref), atol=1e-4), (loss, ref)

    print("KERNEL_OK")
</pallas_src>

<mosaic_0001>
module attributes {stable_mosaic.version = 11 : i64} {
  func.func @_loss_tile_kernel(%arg0: i32, %arg1: i32, %arg2: memref<2xf32, #tpu.memory_space<smem>>, %arg3: memref<128x32xf32, #tpu.memory_space<vmem>>, %arg4: memref<128x32xf32, #tpu.memory_space<vmem>>, %arg5: memref<128x1xf32, #tpu.memory_space<vmem>>, %arg6: memref<1x128xf32, #tpu.memory_space<vmem>>, %arg7: memref<128x1xf32, #tpu.memory_space<vmem>>, %arg8: memref<1x128xf32, #tpu.memory_space<vmem>>, %arg9: memref<128x1xi32, #tpu.memory_space<vmem>>, %arg10: memref<1x128xi32, #tpu.memory_space<vmem>>, %arg11: memref<1xf32, #tpu.memory_space<smem>>, %arg12: memref<4xf32, #tpu.memory_space<smem>>) attributes {dimension_semantics = [#tpu.dimension_semantics<arbitrary>, #tpu.dimension_semantics<arbitrary>], iteration_bounds = array<i64: 1, 1>, scalar_prefetch = 0 : i64, scratch_operands = 1 : i64, tpu.core_type = #tpu.core_type<tc>, window_params = [{transform_indices = @transform_0, window_bounds = array<i64: 2>}, {transform_indices = @transform_1, window_bounds = array<i64: 128, 32>}, {transform_indices = @transform_2, window_bounds = array<i64: 128, 32>}, {transform_indices = @transform_3, window_bounds = array<i64: 128, 1>}, {transform_indices = @transform_4, window_bounds = array<i64: 1, 128>}, {transform_indices = @transform_5, window_bounds = array<i64: 128, 1>}, {transform_indices = @transform_6, window_bounds = array<i64: 1, 128>}, {transform_indices = @transform_7, window_bounds = array<i64: 128, 1>}, {transform_indices = @transform_8, window_bounds = array<i64: 1, 128>}, {transform_indices = @transform_9, window_bounds = array<i64: 1>}]} {
    %c0_i32 = arith.constant 0 : i32
    %0 = arith.cmpi eq, %arg0, %c0_i32 : i32
    %c0_i32_0 = arith.constant 0 : i32
    %1 = arith.cmpi eq, %arg1, %c0_i32_0 : i32
    %2 = arith.andi %0, %1 : i1
    %3 = arith.extui %2 : i1 to i32
    %c0_i32_1 = arith.constant 0 : i32
    %4 = arith.cmpi ne, %3, %c0_i32_1 : i32
    scf.if %4 {
      %cst_38 = arith.constant 0.000000e+00 : f32
      %c0_39 = arith.constant 0 : index
      %86 = memref.load %arg12[%c0_39] : memref<4xf32, #tpu.memory_space<smem>>
      memref.store %cst_38, %arg12[%c0_39] : memref<4xf32, #tpu.memory_space<smem>>
      %cst_40 = arith.constant 0.000000e+00 : f32
      %c1_41 = arith.constant 1 : index
      %87 = memref.load %arg12[%c1_41] : memref<4xf32, #tpu.memory_space<smem>>
      memref.store %cst_40, %arg12[%c1_41] : memref<4xf32, #tpu.memory_space<smem>>
      %cst_42 = arith.constant 0.000000e+00 : f32
      %c2_43 = arith.constant 2 : index
      %88 = memref.load %arg12[%c2_43] : memref<4xf32, #tpu.memory_space<smem>>
      memref.store %cst_42, %arg12[%c2_43] : memref<4xf32, #tpu.memory_space<smem>>
      %cst_44 = arith.constant 0.000000e+00 : f32
      %c3_45 = arith.constant 3 : index
      %89 = memref.load %arg12[%c3_45] : memref<4xf32, #tpu.memory_space<smem>>
      memref.store %cst_44, %arg12[%c3_45] : memref<4xf32, #tpu.memory_space<smem>>
    } else {
    }
    %c0 = arith.constant 0 : index
    %c0_2 = arith.constant 0 : index
    %5 = vector.load %arg3[%c0, %c0_2] : memref<128x32xf32, #tpu.memory_space<vmem>>, vector<128x32xf32>
    %c0_3 = arith.constant 0 : index
    %c0_4 = arith.constant 0 : index
    %6 = vector.load %arg4[%c0_3, %c0_4] : memref<128x32xf32, #tpu.memory_space<vmem>>, vector<128x32xf32>
    %cst = arith.constant dense<0.000000e+00> : vector<128x128xf32>
    %7 = tpu.matmul %5, %6, %cst {dimension_numbers = #tpu.dot_dimension_numbers<[1], [1], [0], [0], [0, 0, 1, 0], [], []>} : vector<128x32xf32>, vector<128x32xf32>, vector<128x128xf32> -> vector<128x128xf32>
    %cst_5 = arith.constant 2.000000e+00 : f32
    %8 = vector.broadcast %cst_5 : f32 to vector<128x128xf32>
    %9 = arith.mulf %8, %7 : vector<128x128xf32>
    %cst_6 = arith.constant 2.000000e+00 : f32
    %10 = vector.broadcast %cst_6 : f32 to vector<128x128xf32>
    %11 = arith.subf %10, %9 : vector<128x128xf32>
    %cst_7 = arith.constant 0.000000e+00 : f32
    %12 = vector.broadcast %cst_7 : f32 to vector<128x128xf32>
    %13 = arith.maximumf %11, %12 : vector<128x128xf32>
    %14 = math.sqrt %13 : vector<128x128xf32>
    %c0_8 = arith.constant 0 : index
    %c0_9 = arith.constant 0 : index
    %15 = vector.load %arg5[%c0_8, %c0_9] : memref<128x1xf32, #tpu.memory_space<vmem>>, vector<128x1xf32>
    %c0_10 = arith.constant 0 : index
    %c0_11 = arith.constant 0 : index
    %16 = vector.load %arg6[%c0_10, %c0_11] : memref<1x128xf32, #tpu.memory_space<vmem>>, vector<1x128xf32>
    %17 = vector.broadcast %15 : vector<128x1xf32> to vector<128x128xf32>
    %18 = vector.broadcast %16 : vector<1x128xf32> to vector<128x128xf32>
    %19 = arith.subf %17, %18 : vector<128x128xf32>
    %20 = math.absf %19 : vector<128x128xf32>
    %c0_12 = arith.constant 0 : index
    %c0_13 = arith.constant 0 : index
    %21 = vector.load %arg7[%c0_12, %c0_13] : memref<128x1xf32, #tpu.memory_space<vmem>>, vector<128x1xf32>
    %cst_14 = arith.constant 0.000000e+00 : f32
    %22 = vector.broadcast %cst_14 : f32 to vector<128x1xf32>
    %23 = arith.cmpf ogt, %21, %22 : vector<128x1xf32>
    %c0_15 = arith.constant 0 : index
    %c0_16 = arith.constant 0 : index
    %24 = vector.load %arg8[%c0_15, %c0_16] : memref<1x128xf32, #tpu.memory_space<vmem>>, vector<1x128xf32>
    %cst_17 = arith.constant 0.000000e+00 : f32
    %25 = vector.broadcast %cst_17 : f32 to vector<1x128xf32>
    %26 = arith.cmpf ogt, %24, %25 : vector<1x128xf32>
    %27 = vector.broadcast %23 : vector<128x1xi1> to vector<128x128xi1>
    %28 = vector.broadcast %26 : vector<1x128xi1> to vector<128x128xi1>
    %29 = arith.andi %27, %28 : vector<128x128xi1>
    %c0_18 = arith.constant 0 : index
    %c0_19 = arith.constant 0 : index
    %30 = vector.load %arg9[%c0_18, %c0_19] : memref<128x1xi32, #tpu.memory_space<vmem>>, vector<128x1xi32>
    %c0_20 = arith.constant 0 : index
    %c0_21 = arith.constant 0 : index
    %31 = vector.load %arg10[%c0_20, %c0_21] : memref<1x128xi32, #tpu.memory_space<vmem>>, vector<1x128xi32>
    %32 = vector.broadcast %30 : vector<128x1xi32> to vector<128x128xi32>
    %33 = vector.broadcast %31 : vector<1x128xi32> to vector<128x128xi32>
    %34 = arith.cmpi ne, %32, %33 : vector<128x128xi32>
    %c0_22 = arith.constant 0 : index
    %35 = memref.load %arg2[%c0_22] : memref<2xf32, #tpu.memory_space<smem>>
    %c1 = arith.constant 1 : index
    %36 = memref.load %arg2[%c1] : memref<2xf32, #tpu.memory_space<smem>>
    %37 = vector.broadcast %35 : f32 to vector<128x128xf32>
    %38 = arith.cmpf olt, %20, %37 : vector<128x128xf32>
    %39 = arith.andi %38, %29 : vector<128x128xi1>
    %40 = arith.andi %39, %34 : vector<128x128xi1>
    %41 = arith.extui %40 : vector<128x128xi1> to vector<128x128xi32>
    %42 = arith.sitofp %41 : vector<128x128xi32> to vector<128x128xf32>
    %43 = vector.broadcast %36 : f32 to vector<128x128xf32>
    %44 = arith.cmpf ogt, %20, %43 : vector<128x128xf32>
    %45 = arith.extui %44 : vector<128x128xi1> to vector<128x128xi32>
    %46 = arith.sitofp %45 : vector<128x128xi32> to vector<128x128xf32>
    %cst_23 = arith.constant 1.000000e+00 : f32
    %47 = vector.broadcast %cst_23 : f32 to vector<128x128xf32>
    %48 = arith.subf %47, %14 : vector<128x128xf32>
    %cst_24 = arith.constant 0.000000e+00 : f32
    %49 = vector.broadcast %cst_24 : f32 to vector<128x128xf32>
    %50 = arith.maximumf %48, %49 : vector<128x128xf32>
    %c0_25 = arith.constant 0 : index
    %51 = memref.load %arg12[%c0_25] : memref<4xf32, #tpu.memory_space<smem>>
    %52 = arith.mulf %14, %42 : vector<128x128xf32>
    %53 = vector.shape_cast %52 : vector<128x128xf32> to vector<1x128x128xf32>
    %cst_26 = arith.constant dense<0.000000e+00> : vector<1xf32>
    %54 = vector.multi_reduction <add>, %53, %cst_26 [1, 2] : vector<1x128x128xf32> to vector<1xf32>
    %55 = vector.shape_cast %54 : vector<1xf32> to vector<1x1x1xf32>
    %56 = vector.extract %55[0, 0, 0] : f32 from vector<1x1x1xf32>
    %57 = arith.addf %51, %56 : f32
    %c0_27 = arith.constant 0 : index
    %58 = memref.load %arg12[%c0_27] : memref<4xf32, #tpu.memory_space<smem>>
    memref.store %57, %arg12[%c0_27] : memref<4xf32, #tpu.memory_space<smem>>
    %c1_28 = arith.constant 1 : index
    %59 = memref.load %arg12[%c1_28] : memref<4xf32, #tpu.memory_space<smem>>
    %60 = vector.shape_cast %42 : vector<128x128xf32> to vector<1x128x128xf32>
    %cst_29 = arith.constant dense<0.000000e+00> : vector<1xf32>
    %61 = vector.multi_reduction <add>, %60, %cst_29 [1, 2] : vector<1x128x128xf32> to vector<1xf32>
    %62 = vector.shape_cast %61 : vector<1xf32> to vector<1x1x1xf32>
    %63 = vector.extract %62[0, 0, 0] : f32 from vector<1x1x1xf32>
    %64 = arith.addf %59, %63 : f32
    %c1_30 = arith.constant 1 : index
    %65 = memref.load %arg12[%c1_30] : memref<4xf32, #tpu.memory_space<smem>>
    memref.store %64, %arg12[%c1_30] : memref<4xf32, #tpu.memory_space<smem>>
    %c2 = arith.constant 2 : index
    %66 = memref.load %arg12[%c2] : memref<4xf32, #tpu.memory_space<smem>>
    %67 = arith.mulf %50, %46 : vector<128x128xf32>
    %68 = vector.shape_cast %67 : vector<128x128xf32> to vector<1x128x128xf32>
    %cst_31 = arith.constant dense<0.000000e+00> : vector<1xf32>
    %69 = vector.multi_reduction <add>, %68, %cst_31 [1, 2] : vector<1x128x128xf32> to vector<1xf32>
    %70 = vector.shape_cast %69 : vector<1xf32> to vector<1x1x1xf32>
    %71 = vector.extract %70[0, 0, 0] : f32 from vector<1x1x1xf32>
    %72 = arith.addf %66, %71 : f32
    %c2_32 = arith.constant 2 : index
    %73 = memref.load %arg12[%c2_32] : memref<4xf32, #tpu.memory_space<smem>>
    memref.store %72, %arg12[%c2_32] : memref<4xf32, #tpu.memory_space<smem>>
    %c3 = arith.constant 3 : index
    %74 = memref.load %arg12[%c3] : memref<4xf32, #tpu.memory_space<smem>>
    %75 = vector.shape_cast %46 : vector<128x128xf32> to vector<1x128x128xf32>
    %cst_33 = arith.constant dense<0.000000e+00> : vector<1xf32>
    %76 = vector.multi_reduction <add>, %75, %cst_33 [1, 2] : vector<1x128x128xf32> to vector<1xf32>
    %77 = vector.shape_cast %76 : vector<1xf32> to vector<1x1x1xf32>
    %78 = vector.extract %77[0, 0, 0] : f32 from vector<1x1x1xf32>
    %79 = arith.addf %74, %78 : f32
    %c3_34 = arith.constant 3 : index
    %80 = memref.load %arg12[%c3_34] : memref<4xf32, #tpu.memory_space<smem>>
    memref.store %79, %arg12[%c3_34] : memref<4xf32, #tpu.memory_space<smem>>
    %c0_i32_35 = arith.constant 0 : i32
    %81 = arith.cmpi eq, %arg0, %c0_i32_35 : i32
    %c0_i32_36 = arith.constant 0 : i32
    %82 = arith.cmpi eq, %arg1, %c0_i32_36 : i32
    %83 = arith.andi %81, %82 : i1
    %84 = arith.extui %83 : i1 to i32
    %c0_i32_37 = arith.constant 0 : i32
    %85 = arith.cmpi ne, %84, %c0_i32_37 : i32
    scf.if %85 {
      %c0_38 = arith.constant 0 : index
      %86 = memref.load %arg12[%c0_38] : memref<4xf32, #tpu.memory_space<smem>>
      %c1_39 = arith.constant 1 : index
      %87 = memref.load %arg12[%c1_39] : memref<4xf32, #tpu.memory_space<smem>>
      %c2_40 = arith.constant 2 : index
      %88 = memref.load %arg12[%c2_40] : memref<4xf32, #tpu.memory_space<smem>>
      %c3_41 = arith.constant 3 : index
      %89 = memref.load %arg12[%c3_41] : memref<4xf32, #tpu.memory_space<smem>>
      %cst_42 = arith.constant 0.000000e+00 : f32
      %90 = arith.cmpf ogt, %87, %cst_42 : f32
      %cst_43 = arith.constant 1.000000e+00 : f32
      %91 = arith.maximumf %87, %cst_43 : f32
      %92 = arith.divf %86, %91 : f32
      %cst_44 = arith.constant 0.000000e+00 : f32
      %93 = arith.select %90, %92, %cst_44 : f32
      %cst_45 = arith.constant 0.000000e+00 : f32
      %94 = arith.cmpf ogt, %89, %cst_45 : f32
      %cst_46 = arith.constant 1.000000e+00 : f32
      %95 = arith.maximumf %89, %cst_46 : f32
      %96 = arith.divf %88, %95 : f32
      %cst_47 = arith.constant 0.000000e+00 : f32
      %97 = arith.select %94, %96, %cst_47 : f32
      %98 = arith.addf %93, %97 : f32
      %c0_48 = arith.constant 0 : index
      %99 = memref.load %arg11[%c0_48] : memref<1xf32, #tpu.memory_space<smem>>
      memref.store %98, %arg11[%c0_48] : memref<1xf32, #tpu.memory_space<smem>>
    } else {
    }
    return
  }
  func.func @transform_0(%arg0: i32, %arg1: i32) -> i32 {
    %c0_i32 = arith.constant 0 : i32
    %c0_i32_0 = arith.constant 0 : i32
    return %c0_i32 : i32
  }
  func.func @transform_1(%arg0: i32, %arg1: i32) -> (i32, i32) {
    %c0_i32 = arith.constant 0 : i32
    %c0_i32_0 = arith.constant 0 : i32
    return %arg0, %c0_i32 : i32, i32
  }
  func.func @transform_2(%arg0: i32, %arg1: i32) -> (i32, i32) {
    %c0_i32 = arith.constant 0 : i32
    %c0_i32_0 = arith.constant 0 : i32
    return %arg1, %c0_i32 : i32, i32
  }
  func.func @transform_3(%arg0: i32, %arg1: i32) -> (i32, i32) {
    %c0_i32 = arith.constant 0 : i32
    %c0_i32_0 = arith.constant 0 : i32
    return %arg0, %c0_i32 : i32, i32
  }
  func.func @transform_4(%arg0: i32, %arg1: i32) -> (i32, i32) {
    %c0_i32 = arith.constant 0 : i32
    %c0_i32_0 = arith.constant 0 : i32
    return %c0_i32, %arg1 : i32, i32
  }
  func.func @transform_5(%arg0: i32, %arg1: i32) -> (i32, i32) {
    %c0_i32 = arith.constant 0 : i32
    %c0_i32_0 = arith.constant 0 : i32
    return %arg0, %c0_i32 : i32, i32
  }
  func.func @transform_6(%arg0: i32, %arg1: i32) -> (i32, i32) {
    %c0_i32 = arith.constant 0 : i32
    %c0_i32_0 = arith.constant 0 : i32
    return %c0_i32, %arg1 : i32, i32
  }
  func.func @transform_7(%arg0: i32, %arg1: i32) -> (i32, i32) {
    %c0_i32 = arith.constant 0 : i32
    %c0_i32_0 = arith.constant 0 : i32
    return %arg0, %c0_i32 : i32, i32
  }
  func.func @transform_8(%arg0: i32, %arg1: i32) -> (i32, i32) {
    %c0_i32 = arith.constant 0 : i32
    %c0_i32_0 = arith.constant 0 : i32
    return %c0_i32, %arg1 : i32, i32
  }
  func.func @transform_9(%arg0: i32, %arg1: i32) -> i32 {
    %c0_i32 = arith.constant 0 : i32
    %c0_i32_0 = arith.constant 0 : i32
    return %c0_i32 : i32
  }
}

</mosaic_0001>

<llo_original>
// kernel: tpu_custom_call.1
$region0: #{tpu_custom_call.1}
  #allocation0 [shape = 'u32[]', space=smem, size = 0x4, offset = 0x4, fixed_abs, tag = 'smem constant byte address 0x4 - core index']
  #allocation1 [shape = 'u32[144,128]{1,0:T(1,128)}', space=vmem, size = 0x12000, scoped, tag = 'internal scratch']
  #allocation2 [shape = 'f32[4]{0:T(128)}', space=smem, size = 0x200, scoped, tag = 'scratch operand']
  %s0 = inlined_call_operand.vmem [shape: f32[2], index: 0, kind: input, shape index: {}]
  %s1 = inlined_call_operand.vmem [shape: f32[128,32], index: 1, kind: input, shape index: {}]
  %s2 = inlined_call_operand.vmem [shape: f32[128,32], index: 2, kind: input, shape index: {}]
  %s3 = inlined_call_operand.vmem [shape: f32[128,1], index: 3, kind: input, shape index: {}]
  %s4 = inlined_call_operand.vmem [shape: f32[1,128], index: 4, kind: input, shape index: {}]
  %s5 = inlined_call_operand.vmem [shape: f32[128,1], index: 5, kind: input, shape index: {}]
  %s6 = inlined_call_operand.vmem [shape: f32[1,128], index: 6, kind: input, shape index: {}]
  %s7 = inlined_call_operand.vmem [shape: s32[128,1], index: 7, kind: input, shape index: {}]
  %s8 = inlined_call_operand.vmem [shape: s32[1,128], index: 8, kind: input, shape index: {}]
  %s9 = inlined_call_operand.hbm [shape: f32[1], index: 9, kind: output, shape index: {}]
  %s10 = sld [smem:[#allocation0]]
  $region58: #{tpu_custom_call.1} parent=0
    _
  %s12 = ssub.s32 1, %s10
  %s13 = scalar_select 0, %s12, %s10
  $region1: #{tpu_custom_call.1} parent=0
    #allocation3 [shape = 'u8[512]{0}', space=smem, size = 0x200, scoped, tag = 'input window, operand 0, single buffered']
    #allocation4 [shape = 's32[1]{0}', space=sflag, size = 0x4, scoped, tag = 'scoped memory for tpu_custom_call.1']
    #allocation5 [shape = 's32[1]{0}', space=sflag, size = 0x4, scoped, tag = 'scoped memory for tpu_custom_call.1']
    #allocation6 [shape = 'u8[512]{0}', space=smem, size = 0x200, scoped, tag = 'output window, operand 0, single buffered']
    %14 = vsyncpa [#allocation5], 0
    %15 = vsyncpa [#allocation4], 0
    // Predicated region
    $region2: #{tpu_custom_call.1} parent=1 // pred_check
      _
    $region3: #{tpu_custom_call.1} parent=1 // pred_check_branch
      %17 = sbr.rel (0) target = $region5
    $region4: #{tpu_custom_call.1} parent=1 // pred_region
      %s19 = ssub.s32 16, 16
      %20 = vsyncadd [#allocation5], %s19
      %s22 = sshll.u32 %s0, 4
      %s23 = int_to_ptr.vmem [resolvable:$true] %s22
      %25 = dma.vmem_to_smem %s23, 16, [#allocation3], [#allocation5]
    $region5: #{tpu_custom_call.1} parent=1 // pred_fallthru
      _
    // Predicated region
    $region6: #{tpu_custom_call.1} parent=1 // pred_check
      _
    $region7: #{tpu_custom_call.1} parent=1 // pred_check_branch
      %27 = sbr.rel (0) target = $region9
    $region8: #{tpu_custom_call.1} parent=1 // pred_region
      _
    $region9: #{tpu_custom_call.1} parent=1 // pred_fallthru
      _
    // Predicated region
    $region10: #{tpu_custom_call.1} parent=1 // pred_check
      _
    $region11: #{tpu_custom_call.1} parent=1 // pred_check_branch
      %29 = sbr.rel (0) target = $region13
    $region12: #{tpu_custom_call.1} parent=1 // pred_region
      _
    $region13: #{tpu_custom_call.1} parent=1 // pred_fallthru
      _
    // Predicated region
    $region14: #{tpu_custom_call.1} parent=1 // pred_check
      _
    $region15: #{tpu_custom_call.1} parent=1 // pred_check_branch
      %31 = sbr.rel (0) target = $region17
    $region16: #{tpu_custom_call.1} parent=1 // pred_region
      _
    $region17: #{tpu_custom_call.1} parent=1 // pred_fallthru
      _
    // Predicated region
    $region18: #{tpu_custom_call.1} parent=1 // pred_check
      _
    $region19: #{tpu_custom_call.1} parent=1 // pred_check_branch
      %33 = sbr.rel (0) target = $region21
    $region20: #{tpu_custom_call.1} parent=1 // pred_region
      _
    $region21: #{tpu_custom_call.1} parent=1 // pred_fallthru
      _
    // Predicated region
    $region22: #{tpu_custom_call.1} parent=1 // pred_check
      _
    $region23: #{tpu_custom_call.1} parent=1 // pred_check_branch
      %35 = sbr.rel (0) target = $region25
    $region24: #{tpu_custom_call.1} parent=1 // pred_region
      _
    $region25: #{tpu_custom_call.1} parent=1 // pred_fallthru
      _
    // Predicated region
    $region26: #{tpu_custom_call.1} parent=1 // pred_check
      _
    $region27: #{tpu_custom_call.1} parent=1 // pred_check_branch
      %37 = sbr.rel (0) target = $region29
    $region28: #{tpu_custom_call.1} parent=1 // pred_region
      _
    $region29: #{tpu_custom_call.1} parent=1 // pred_fallthru
      _
    // Predicated region
    $region30: #{tpu_custom_call.1} parent=1 // pred_check
      _
    $region31: #{tpu_custom_call.1} parent=1 // pred_check_branch
      %39 = sbr.rel (0) target = $region33
    $region32: #{tpu_custom_call.1} parent=1 // pred_region
      _
    $region33: #{tpu_custom_call.1} parent=1 // pred_fallthru
      _
    // Predicated region
    $region34: #{tpu_custom_call.1} parent=1 // pred_check
      _
    $region35: #{tpu_custom_call.1} parent=1 // pred_check_branch
      %41 = sbr.rel (0) target = $region37
    $region36: #{tpu_custom_call.1} parent=1 // pred_region
      _
    $region37: #{tpu_custom_call.1} parent=1 // pred_fallthru
      _
    // Predicated region
    $region38: #{tpu_custom_call.1} parent=1 // pred_check
      _
    $region39: #{tpu_custom_call.1} parent=1 // pred_check_branch
      %43 = sbr.rel (0) target = $region41
    $region40: #{tpu_custom_call.1} parent=1 // pred_region
      %44 = dma.done [#allocation5], 16
    $region41: #{tpu_custom_call.1} parent=1 // pred_fallthru
      _
    %45 = sfence
    %p46 = scmp.eq.s32.totalorder 0, 0
    %p47 = scmp.eq.s32.totalorder 0, 0
    %p48 = pnand %p46, %p47
    %p49 = pneg %p48
    // Predicated region
    $region42: #{tpu_custom_call.1} parent=1 // pred_check
      _
    $region43: #{tpu_custom_call.1} parent=1 // pred_check_branch
      %51 = sbr.rel (%p48) target = $region45
    $region44: #{tpu_custom_call.1} parent=1 // pred_region
      %s52 = scalar_lea.smem [#allocation2], 0
      %53 = sst [smem:[%s52]] 0.0
      %s54 = scalar_lea.smem [#allocation2], 1
      %55 = sst [smem:[%s54]] 0.0
      %s56 = scalar_lea.smem [#allocation2], 2
      %57 = sst [smem:[%s56]] 0.0
      %s58 = scalar_lea.smem [#allocation2], 3
      %59 = sst [smem:[%s58]] 0.0
    $region45: #{tpu_custom_call.1} parent=1 // pred_fallthru
      _
    %v60 = vld [vmem:[%s1] sm:$0xff]
    %v61 = vld [vmem:[%s1 + $0x8] sm:$0xff]
    %v62 = vld [vmem:[%s1 + $0x10] sm:$0xff]
    %v63 = vld [vmem:[%s1 + $0x18] sm:$0xff]
    %v64 = vld [vmem:[%s1 + $0x20] sm:$0xff]
    %v65 = vld [vmem:[%s1 + $0x28] sm:$0xff]
    %v66 = vld [vmem:[%s1 + $0x30] sm:$0xff]
    %v67 = vld [vmem:[%s1 + $0x38] sm:$0xff]
    %v68 = vld [vmem:[%s1 + $0x40] sm:$0xff]
    %v69 = vld [vmem:[%s1 + $0x48] sm:$0xff]
    %v70 = vld [vmem:[%s1 + $0x50] sm:$0xff]
    %v71 = vld [vmem:[%s1 + $0x58] sm:$0xff]
    %v72 = vld [vmem:[%s1 + $0x60] sm:$0xff]
    %v73 = vld [vmem:[%s1 + $0x68] sm:$0xff]
    %v74 = vld [vmem:[%s1 + $0x70] sm:$0xff]
    %v75 = vld [vmem:[%s1 + $0x78] sm:$0xff]
    %v76 = vld [vmem:[%s2] sm:$0xff]
    %v77 = vld [vmem:[%s2 + $0x8] sm:$0xff]
    %v78 = vld [vmem:[%s2 + $0x10] sm:$0xff]
    %v79 = vld [vmem:[%s2 + $0x18] sm:$0xff]
    %v80 = vld [vmem:[%s2 + $0x20] sm:$0xff]
    %v81 = vld [vmem:[%s2 + $0x28] sm:$0xff]
    %v82 = vld [vmem:[%s2 + $0x30] sm:$0xff]
    %v83 = vld [vmem:[%s2 + $0x38] sm:$0xff]
    %v84 = vld [vmem:[%s2 + $0x40] sm:$0xff]
    %v85 = vld [vmem:[%s2 + $0x48] sm:$0xff]
    %v86 = vld [vmem:[%s2 + $0x50] sm:$0xff]
    %v87 = vld [vmem:[%s2 + $0x58] sm:$0xff]
    %v88 = vld [vmem:[%s2 + $0x60] sm:$0xff]
    %v89 = vld [vmem:[%s2 + $0x68] sm:$0xff]
    %v90 = vld [vmem:[%s2 + $0x70] sm:$0xff]
    %v91 = vld [vmem:[%s2 + $0x78] sm:$0xff]
    %vm92 = vcmask 261120
    %v94 = vsel %vm92, %v60, 0
    %v97 = vsel %vm92, %v61, 0
    %v100 = vsel %vm92, %v62, 0
    %v103 = vsel %vm92, %v63, 0
    %v106 = vsel %vm92, %v64, 0
    %v109 = vsel %vm92, %v65, 0
    %v112 = vsel %vm92, %v66, 0
    %v115 = vsel %vm92, %v67, 0
    %v118 = vsel %vm92, %v68, 0
    %v121 = vsel %vm92, %v69, 0
    %v124 = vsel %vm92, %v70, 0
    %v127 = vsel %vm92, %v71, 0
    %v130 = vsel %vm92, %v72, 0
    %v133 = vsel %vm92, %v73, 0
    %v136 = vsel %vm92, %v74, 0
    %v139 = vsel %vm92, %v75, 0
    %v142 = vsel %vm92, %v76, 0
    %v145 = vsel %vm92, %v77, 0
    %v148 = vsel %vm92, %v78, 0
    %v151 = vsel %vm92, %v79, 0
    %v154 = vsel %vm92, %v80, 0
    %v157 = vsel %vm92, %v81, 0
    %v160 = vsel %vm92, %v82, 0
    %v163 = vsel %vm92, %v83, 0
    %v166 = vsel %vm92, %v84, 0
    %v169 = vsel %vm92, %v85, 0
    %v172 = vsel %vm92, %v86, 0
    %v175 = vsel %vm92, %v87, 0
    %v178 = vsel %vm92, %v88, 0
    %v181 = vsel %vm92, %v89, 0
    %v184 = vsel %vm92, %v90, 0
    %v187 = vsel %vm92, %v91, 0
    %189 = vmatprep.subr.mxu0 0.0
    %190 = vmatpush1.xpose.msra.mxu0 %v142
    %191 = vmatprep.subr.mxu0 0.0
    %192 = vmatpush1.xpose.msra.mxu0 %v145
    %193 = vmatprep.subr.mxu0 0.0
    %194 = vmatpush1.xpose.msra.mxu0 %v148
    %195 = vmatprep.subr.mxu0 0.0
    %196 = vmatpush1.xpose.msra.mxu0 %v151
    %197 = vmatprep.subr.mxu0 0.0
    %198 = vmatpush1.xpose.msra.mxu0 %v154
    %199 = vmatprep.subr.mxu0 0.0
    %200 = vmatpush1.xpose.msra.mxu0 %v157
    %201 = vmatprep.subr.mxu0 0.0
    %202 = vmatpush1.xpose.msra.mxu0 %v160
    %203 = vmatprep.subr.mxu0 0.0
    %204 = vmatpush1.xpose.msra.mxu0 %v163
    %205 = vmatprep.subr.mxu0 0.0
    %206 = vmatpush1.xpose.msra.mxu0 %v166
    %207 = vmatprep.subr.mxu0 0.0
    %208 = vmatpush1.xpose.msra.mxu0 %v169
    %209 = vmatprep.subr.mxu0 0.0
    %210 = vmatpush1.xpose.msra.mxu0 %v172
    %211 = vmatprep.subr.mxu0 0.0
    %212 = vmatpush1.xpose.msra.mxu0 %v175
    %213 = vmatprep.subr.mxu0 0.0
    %214 = vmatpush1.xpose.msra.mxu0 %v178
    %215 = vmatprep.subr.mxu0 0.0
    %216 = vmatpush1.xpose.msra.mxu0 %v181
    %217 = vmatprep.subr.mxu0 0.0
    %218 = vmatpush1.xpose.msra.mxu0 %v184
    %219 = vmatprep.subr.mxu0 0.0
    %220 = vmatpush1.xpose.msra.mxu0 %v187
    %221 = vmatprep.subr.mxu0 0.0
    %222 = vmatpush1.xpose.msra.mxu0 0.0
    %223 = vmatprep.subr.mxu0 0.0
    %224 = vmatpush1.xpose.msra.mxu0 0.0
    %225 = vmatprep.subr.mxu0 0.0
    %226 = vmatpush1.xpose.msra.mxu0 0.0
    %227 = vmatprep.subr.mxu0 0.0
    %228 = vmatpush1.xpose.msra.mxu0 0.0
    %229 = vmatprep.subr.mxu0 0.0
    %230 = vmatpush1.xpose.msra.mxu0 0.0
    %231 = vmatprep.subr.mxu0 0.0
    %232 = vmatpush1.xpose.msra.mxu0 0.0
    %233 = vmatprep.subr.mxu0 0.0
    %234 = vmatpush1.xpose.msra.mxu0 0.0
    %235 = vmatprep.subr.mxu0 0.0
    %236 = vmatpush1.xpose.msra.mxu0 0.0
    %237 = vmatprep.subr.mxu0 0.0
    %238 = vmatpush1.xpose.msra.mxu0 0.0
    %239 = vmatprep.subr.mxu0 0.0
    %240 = vmatpush1.xpose.msra.mxu0 0.0
    %241 = vmatprep.subr.mxu0 0.0
    %242 = vmatpush1.xpose.msra.mxu0 0.0
    %243 = vmatprep.subr.mxu0 0.0
    %244 = vmatpush1.xpose.msra.mxu0 0.0
    %245 = vmatprep.subr.mxu0 0.0
    %246 = vmatpush1.xpose.msra.mxu0 0.0
    %247 = vmatprep.subr.mxu0 0.0
    %248 = vmatpush1.xpose.msra.mxu0 0.0
    %249 = vmatprep.subr.mxu0 0.0
    %250 = vmatpush1.xpose.msra.mxu0 0.0
    %251 = vmatprep.subr.mxu0 0.0
    %252 = vmatpush1.xpose.msra.mxu0 0.0
    %253 = vmatprep.mubr.f32.mxu0 0.0
    %254 = vmatmul.mubr.f32.gmra.mrb[0].mxu0 %v94
    %v255 = vpop.f32.mrb[0].mxu0
    %v256 = vadd.f32 0.0, %v255
    %v257 = vpop.f32.mrb[0].mxu0
    %258 = vmatprep.mubr.f32.mxu0 0.0
    %259 = vmatmul.mubr.f32.gmra.mrb[0].mxu0 %v97
    %v260 = vpop.f32.mrb[0].mxu0
    %v261 = vadd.f32 0.0, %v260
    %v262 = vpop.f32.mrb[0].mxu0
    %263 = vmatprep.mubr.f32.mxu0 0.0
    %264 = vmatmul.mubr.f32.gmra.mrb[0].mxu0 %v100
    %v265 = vpop.f32.mrb[0].mxu0
    %v266 = vadd.f32 0.0, %v265
    %v267 = vpop.f32.mrb[0].mxu0
    %268 = vmatprep.mubr.f32.mxu0 0.0
    %269 = vmatmul.mubr.f32.gmra.mrb[0].mxu0 %v103
    %v270 = vpop.f32.mrb[0].mxu0
    %v271 = vadd.f32 0.0, %v270
    %v272 = vpop.f32.mrb[0].mxu0
    %273 = vmatprep.mubr.f32.mxu0 0.0
    %274 = vmatmul.mubr.f32.gmra.mrb[0].mxu0 %v106
    %v275 = vpop.f32.mrb[0].mxu0
    %v276 = vadd.f32 0.0, %v275
    %v277 = vpop.f32.mrb[0].mxu0
    %278 = vmatprep.mubr.f32.mxu0 0.0
    %279 = vmatmul.mubr.f32.gmra.mrb[0].mxu0 %v109
    %v280 = vpop.f32.mrb[0].mxu0
    %v281 = vadd.f32 0.0, %v280
    %v282 = vpop.f32.mrb[0].mxu0
    %283 = vmatprep.mubr.f32.mxu0 0.0
    %284 = vmatmul.mubr.f32.gmra.mrb[0].mxu0 %v112
    %v285 = vpop.f32.mrb[0].mxu0
    %v286 = vadd.f32 0.0, %v285
    %v287 = vpop.f32.mrb[0].mxu0
    %288 = vmatprep.mubr.f32.mxu0 0.0
    %289 = vmatmul.mubr.f32.gmra.mrb[0].mxu0 %v115
    %v290 = vpop.f32.mrb[0].mxu0
    %v291 = vadd.f32 0.0, %v290
    %v292 = vpop.f32.mrb[0].mxu0
    %293 = vmatprep.mubr.f32.mxu0 0.0
    %294 = vmatmul.mubr.f32.gmra.mrb[0].mxu0 %v118
    %v295 = vpop.f32.mrb[0].mxu0
    %v296 = vadd.f32 0.0, %v295
    %v297 = vpop.f32.mrb[0].mxu0
    %298 = vmatprep.mubr.f32.mxu0 0.0
    %299 = vmatmul.mubr.f32.gmra.mrb[0].mxu0 %v121
    %v300 = vpop.f32.mrb[0].mxu0
    %v301 = vadd.f32 0.0, %v300
    %v302 = vpop.f32.mrb[0].mxu0
    %303 = vmatprep.mubr.f32.mxu0 0.0
    %304 = vmatmul.mubr.f32.gmra.mrb[0].mxu0 %v124
    %v305 = vpop.f32.mrb[0].mxu0
    %v306 = vadd.f32 0.0, %v305
    %v307 = vpop.f32.mrb[0].mxu0
    %308 = vmatprep.mubr.f32.mxu0 0.0
    %309 = vmatmul.mubr.f32.gmra.mrb[0].mxu0 %v127
    %v310 = vpop.f32.mrb[0].mxu0
    %v311 = vadd.f32 0.0, %v310
    %v312 = vpop.f32.mrb[0].mxu0
    %313 = vmatprep.mubr.f32.mxu0 0.0
    %314 = vmatmul.mubr.f32.gmra.mrb[0].mxu0 %v130
    %v315 = vpop.f32.mrb[0].mxu0
    %v316 = vadd.f32 0.0, %v315
    %v317 = vpop.f32.mrb[0].mxu0
    %318 = vmatprep.mubr.f32.mxu0 0.0
    %319 = vmatmul.mubr.f32.gmra.mrb[0].mxu0 %v133
    %v320 = vpop.f32.mrb[0].mxu0
    %v321 = vadd.f32 0.0, %v320
    %v322 = vpop.f32.mrb[0].mxu0
    %323 = vmatprep.mubr.f32.mxu0 0.0
    %324 = vmatmul.mubr.f32.gmra.mrb[0].mxu0 %v136
    %v325 = vpop.f32.mrb[0].mxu0
    %v326 = vadd.f32 0.0, %v325
    %v327 = vpop.f32.mrb[0].mxu0
    %328 = vmatprep.mubr.f32.mxu0 0.0
    %329 = vmatmul.mubr.f32.gmra.mrb[0].mxu0 %v139
    %v330 = vpop.f32.mrb[0].mxu0
    %v331 = vadd.f32 0.0, %v330
    %v332 = vpop.f32.mrb[0].mxu0
    %333 = vdwg.mxu0
    %v334 = vmul.f32 %v256, 2.0
    %v335 = vmul.f32 %v261, 2.0
    %v336 = vmul.f32 %v266, 2.0
    %v337 = vmul.f32 %v271, 2.0
    %v338 = vmul.f32 %v276, 2.0
    %v339 = vmul.f32 %v281, 2.0
    %v340 = vmul.f32 %v286, 2.0
    %v341 = vmul.f32 %v291, 2.0
    %v342 = vmul.f32 %v296, 2.0
    %v343 = vmul.f32 %v301, 2.0
    %v344 = vmul.f32 %v306, 2.0
    %v345 = vmul.f32 %v311, 2.0
    %v346 = vmul.f32 %v316, 2.0
    %v347 = vmul.f32 %v321, 2.0
    %v348 = vmul.f32 %v326, 2.0
    %v349 = vmul.f32 %v331, 2.0
    %v350 = vsub.f32 2.0, %v334
    %v351 = vsub.f32 2.0, %v335
    %v352 = vsub.f32 2.0, %v336
    %v353 = vsub.f32 2.0, %v337
    %v354 = vsub.f32 2.0, %v338
    %v355 = vsub.f32 2.0, %v339
    %v356 = vsub.f32 2.0, %v340
    %v357 = vsub.f32 2.0, %v341
    %v358 = vsub.f32 2.0, %v342
    %v359 = vsub.f32 2.0, %v343
    %v360 = vsub.f32 2.0, %v344
    %v361 = vsub.f32 2.0, %v345
    %v362 = vsub.f32 2.0, %v346
    %v363 = vsub.f32 2.0, %v347
    %v364 = vsub.f32 2.0, %v348
    %v365 = vsub.f32 2.0, %v349
    %v366 = vmax.f32 %v350, 0.0
    %v367 = vmax.f32 %v351, 0.0
    %v368 = vmax.f32 %v352, 0.0
    %v369 = vmax.f32 %v353, 0.0
    %v370 = vmax.f32 %v354, 0.0
    %v371 = vmax.f32 %v355, 0.0
    %v372 = vmax.f32 %v356, 0.0
    %v373 = vmax.f32 %v357, 0.0
    %v374 = vmax.f32 %v358, 0.0
    %v375 = vmax.f32 %v359, 0.0
    %v376 = vmax.f32 %v360, 0.0
    %v377 = vmax.f32 %v361, 0.0
    %v378 = vmax.f32 %v362, 0.0
    %v379 = vmax.f32 %v363, 0.0
    %v380 = vmax.f32 %v364, 0.0
    %v381 = vmax.f32 %v365, 0.0
    %v382 = vrsqrt.pop %v366
    %v383 = vmul.f32 %v366, %v382
    %vm384 = vcmp.eq.f32.partialorder %v366, inf
    %v385 = vsel %vm384, %v366, %v383
    %vm386 = vcmp.eq.f32.partialorder %v366, 0.0
    %v387 = vand.u32 %v366, 2147483648
    %v388 = vsel %vm386, %v387, %v385
    %v389 = vrsqrt.pop %v367
    %v390 = vmul.f32 %v367, %v389
    %vm391 = vcmp.eq.f32.partialorder %v367, inf
    %v392 = vsel %vm391, %v367, %v390
    %vm393 = vcmp.eq.f32.partialorder %v367, 0.0
    %v394 = vand.u32 %v367, 2147483648
    %v395 = vsel %vm393, %v394, %v392
    %v396 = vrsqrt.pop %v368
    %v397 = vmul.f32 %v368, %v396
    %vm398 = vcmp.eq.f32.partialorder %v368, inf
    %v399 = vsel %vm398, %v368, %v397
    %vm400 = vcmp.eq.f32.partialorder %v368, 0.0
    %v401 = vand.u32 %v368, 2147483648
    %v402 = vsel %vm400, %v401, %v399
    %v403 = vrsqrt.pop %v369
    %v404 = vmul.f32 %v369, %v403
    %vm405 = vcmp.eq.f32.partialorder %v369, inf
    %v406 = vsel %vm405, %v369, %v404
    %vm407 = vcmp.eq.f32.partialorder %v369, 0.0
    %v408 = vand.u32 %v369, 2147483648
    %v409 = vsel %vm407, %v408, %v406
    %v410 = vrsqrt.pop %v370
    %v411 = vmul.f32 %v370, %v410
    %vm412 = vcmp.eq.f32.partialorder %v370, inf
    %v413 = vsel %vm412, %v370, %v411
    %vm414 = vcmp.eq.f32.partialorder %v370, 0.0
    %v415 = vand.u32 %v370, 2147483648
    %v416 = vsel %vm414, %v415, %v413
    %v417 = vrsqrt.pop %v371
    %v418 = vmul.f32 %v371, %v417
    %vm419 = vcmp.eq.f32.partialorder %v371, inf
    %v420 = vsel %vm419, %v371, %v418
    %vm421 = vcmp.eq.f32.partialorder %v371, 0.0
    %v422 = vand.u32 %v371, 2147483648
    %v423 = vsel %vm421, %v422, %v420
    %v424 = vrsqrt.pop %v372
    %v425 = vmul.f32 %v372, %v424
    %vm426 = vcmp.eq.f32.partialorder %v372, inf
    %v427 = vsel %vm426, %v372, %v425
    %vm428 = vcmp.eq.f32.partialorder %v372, 0.0
    %v429 = vand.u32 %v372, 2147483648
    %v430 = vsel %vm428, %v429, %v427
    %v431 = vrsqrt.pop %v373
    %v432 = vmul.f32 %v373, %v431
    %vm433 = vcmp.eq.f32.partialorder %v373, inf
    %v434 = vsel %vm433, %v373, %v432
    %vm435 = vcmp.eq.f32.partialorder %v373, 0.0
    %v436 = vand.u32 %v373, 2147483648
    %v437 = vsel %vm435, %v436, %v434
    %v438 = vrsqrt.pop %v374
    %v439 = vmul.f32 %v374, %v438
    %vm440 = vcmp.eq.f32.partialorder %v374, inf
    %v441 = vsel %vm440, %v374, %v439
    %vm442 = vcmp.eq.f32.partialorder %v374, 0.0
    %v443 = vand.u32 %v374, 2147483648
    %v444 = vsel %vm442, %v443, %v441
    %v445 = vrsqrt.pop %v375
    %v446 = vmul.f32 %v375, %v445
    %vm447 = vcmp.eq.f32.partialorder %v375, inf
    %v448 = vsel %vm447, %v375, %v446
    %vm449 = vcmp.eq.f32.partialorder %v375, 0.0
    %v450 = vand.u32 %v375, 2147483648
    %v451 = vsel %vm449, %v450, %v448
    %v452 = vrsqrt.pop %v376
    %v453 = vmul.f32 %v376, %v452
    %vm454 = vcmp.eq.f32.partialorder %v376, inf
    %v455 = vsel %vm454, %v376, %v453
    %vm456 = vcmp.eq.f32.partialorder %v376, 0.0
    %v457 = vand.u32 %v376, 2147483648
    %v458 = vsel %vm456, %v457, %v455
    %v459 = vrsqrt.pop %v377
    %v460 = vmul.f32 %v377, %v459
    %vm461 = vcmp.eq.f32.partialorder %v377, inf
    %v462 = vsel %vm461, %v377, %v460
    %vm463 = vcmp.eq.f32.partialorder %v377, 0.0
    %v464 = vand.u32 %v377, 2147483648
    %v465 = vsel %vm463, %v464, %v462
    %v466 = vrsqrt.pop %v378
    %v467 = vmul.f32 %v378, %v466
    %vm468 = vcmp.eq.f32.partialorder %v378, inf
    %v469 = vsel %vm468, %v378, %v467
    %vm470 = vcmp.eq.f32.partialorder %v378, 0.0
    %v471 = vand.u32 %v378, 2147483648
    %v472 = vsel %vm470, %v471, %v469
    %v473 = vrsqrt.pop %v379
    %v474 = vmul.f32 %v379, %v473
    %vm475 = vcmp.eq.f32.partialorder %v379, inf
    %v476 = vsel %vm475, %v379, %v474
    %vm477 = vcmp.eq.f32.partialorder %v379, 0.0
    %v478 = vand.u32 %v379, 2147483648
    %v479 = vsel %vm477, %v478, %v476
    %v480 = vrsqrt.pop %v380
    %v481 = vmul.f32 %v380, %v480
    %vm482 = vcmp.eq.f32.partialorder %v380, inf
    %v483 = vsel %vm482, %v380, %v481
    %vm484 = vcmp.eq.f32.partialorder %v380, 0.0
    %v485 = vand.u32 %v380, 2147483648
    %v486 = vsel %vm484, %v485, %v483
    %v487 = vrsqrt.pop %v381
    %v488 = vmul.f32 %v381, %v487
    %vm489 = vcmp.eq.f32.partialorder %v381, inf
    %v490 = vsel %vm489, %v381, %v488
    %vm491 = vcmp.eq.f32.partialorder %v381, 0.0
    %v492 = vand.u32 %v381, 2147483648
    %v493 = vsel %vm491, %v492, %v490
    %v494 = vld [vmem:[%s3] sm:$0xff]
    %v495 = vld [vmem:[%s3 + $0x8] sm:$0xff]
    %v496 = vld [vmem:[%s3 + $0x10] sm:$0xff]
    %v497 = vld [vmem:[%s3 + $0x18] sm:$0xff]
    %v498 = vld [vmem:[%s3 + $0x20] sm:$0xff]
    %v499 = vld [vmem:[%s3 + $0x28] sm:$0xff]
    %v500 = vld [vmem:[%s3 + $0x30] sm:$0xff]
    %v501 = vld [vmem:[%s3 + $0x38] sm:$0xff]
    %v502 = vld [vmem:[%s3 + $0x40] sm:$0xff]
    %v503 = vld [vmem:[%s3 + $0x48] sm:$0xff]
    %v504 = vld [vmem:[%s3 + $0x50] sm:$0xff]
    %v505 = vld [vmem:[%s3 + $0x58] sm:$0xff]
    %v506 = vld [vmem:[%s3 + $0x60] sm:$0xff]
    %v507 = vld [vmem:[%s3 + $0x68] sm:$0xff]
    %v508 = vld [vmem:[%s3 + $0x70] sm:$0xff]
    %v509 = vld [vmem:[%s3 + $0x78] sm:$0xff]
    %v510 = vld [vmem:[%s4] sm:$0x1]
    %512 = vset.pattern.permute.xlu0 0
    %513 = vperm.xlu0 %512, %v494
    %v514 = vpop.permute.xlu0 %513
    %517 = vset.pattern.permute.xlu0 0
    %518 = vperm.xlu0 %517, %v495
    %v519 = vpop.permute.xlu0 %518
    %522 = vset.pattern.permute.xlu0 0
    %523 = vperm.xlu0 %522, %v496
    %v524 = vpop.permute.xlu0 %523
    %527 = vset.pattern.permute.xlu0 0
    %528 = vperm.xlu0 %527, %v497
    %v529 = vpop.permute.xlu0 %528
    %532 = vset.pattern.permute.xlu0 0
    %533 = vperm.xlu0 %532, %v498
    %v534 = vpop.permute.xlu0 %533
    %537 = vset.pattern.permute.xlu0 0
    %538 = vperm.xlu0 %537, %v499
    %v539 = vpop.permute.xlu0 %538
    %542 = vset.pattern.permute.xlu0 0
    %543 = vperm.xlu0 %542, %v500
    %v544 = vpop.permute.xlu0 %543
    %547 = vset.pattern.permute.xlu0 0
    %548 = vperm.xlu0 %547, %v501
    %v549 = vpop.permute.xlu0 %548
    %552 = vset.pattern.permute.xlu0 0
    %553 = vperm.xlu0 %552, %v502
    %v554 = vpop.permute.xlu0 %553
    %557 = vset.pattern.permute.xlu0 0
    %558 = vperm.xlu0 %557, %v503
    %v559 = vpop.permute.xlu0 %558
    %562 = vset.pattern.permute.xlu0 0
    %563 = vperm.xlu0 %562, %v504
    %v564 = vpop.permute.xlu0 %563
    %567 = vset.pattern.permute.xlu0 0
    %568 = vperm.xlu0 %567, %v505
    %v569 = vpop.permute.xlu0 %568
    %572 = vset.pattern.permute.xlu0 0
    %573 = vperm.xlu0 %572, %v506
    %v574 = vpop.permute.xlu0 %573
    %577 = vset.pattern.permute.xlu0 0
    %578 = vperm.xlu0 %577, %v507
    %v579 = vpop.permute.xlu0 %578
    %582 = vset.pattern.permute.xlu0 0
    %583 = vperm.xlu0 %582, %v508
    %v584 = vpop.permute.xlu0 %583
    %587 = vset.pattern.permute.xlu0 0
    %588 = vperm.xlu0 %587, %v509
    %v589 = vpop.permute.xlu0 %588
    %v592 = vlaneseq
    %v593 = vshrl.u32 %v592, 7
    %v594 = vsub.s32 0, %v593
    %v595 = vrot.slane %v510, %v594
    %v597 = vsub.f32 %v514, %v595
    %v598 = vsub.f32 %v519, %v595
    %v599 = vsub.f32 %v524, %v595
    %v600 = vsub.f32 %v529, %v595
    %v601 = vsub.f32 %v534, %v595
    %v602 = vsub.f32 %v539, %v595
    %v603 = vsub.f32 %v544, %v595
    %v604 = vsub.f32 %v549, %v595
    %v605 = vsub.f32 %v554, %v595
    %v606 = vsub.f32 %v559, %v595
    %v607 = vsub.f32 %v564, %v595
    %v608 = vsub.f32 %v569, %v595
    %v609 = vsub.f32 %v574, %v595
    %v610 = vsub.f32 %v579, %v595
    %v611 = vsub.f32 %v584, %v595
    %v612 = vsub.f32 %v589, %v595
    %v613 = vand.u32 2147483647, %v597
    %v614 = vand.u32 2147483647, %v598
    %v615 = vand.u32 2147483647, %v599
    %v616 = vand.u32 2147483647, %v600
    %v617 = vand.u32 2147483647, %v601
    %v618 = vand.u32 2147483647, %v602
    %v619 = vand.u32 2147483647, %v603
    %v620 = vand.u32 2147483647, %v604
    %v621 = vand.u32 2147483647, %v605
    %v622 = vand.u32 2147483647, %v606
    %v623 = vand.u32 2147483647, %v607
    %v624 = vand.u32 2147483647, %v608
    %v625 = vand.u32 2147483647, %v609
    %v626 = vand.u32 2147483647, %v610
    %v627 = vand.u32 2147483647, %v611
    %v628 = vand.u32 2147483647, %v612
    %v629 = vld [vmem:[%s5] sm:$0xff]
    %v630 = vld [vmem:[%s5 + $0x8] sm:$0xff]
    %v631 = vld [vmem:[%s5 + $0x10] sm:$0xff]
    %v632 = vld [vmem:[%s5 + $0x18] sm:$0xff]
    %v633 = vld [vmem:[%s5 + $0x20] sm:$0xff]
    %v634 = vld [vmem:[%s5 + $0x28] sm:$0xff]
    %v635 = vld [vmem:[%s5 + $0x30] sm:$0xff]
    %v636 = vld [vmem:[%s5 + $0x38] sm:$0xff]
    %v637 = vld [vmem:[%s5 + $0x40] sm:$0xff]
    %v638 = vld [vmem:[%s5 + $0x48] sm:$0xff]
    %v639 = vld [vmem:[%s5 + $0x50] sm:$0xff]
    %v640 = vld [vmem:[%s5 + $0x58] sm:$0xff]
    %v641 = vld [vmem:[%s5 + $0x60] sm:$0xff]
    %v642 = vld [vmem:[%s5 + $0x68] sm:$0xff]
    %v643 = vld [vmem:[%s5 + $0x70] sm:$0xff]
    %v644 = vld [vmem:[%s5 + $0x78] sm:$0xff]
    %vm645 = vcmp.gt.f32.partialorder %v629, 0.0
    %vm646 = vcmp.gt.f32.partialorder %v630, 0.0
    %vm647 = vcmp.gt.f32.partialorder %v631, 0.0
    %vm648 = vcmp.gt.f32.partialorder %v632, 0.0
    %vm649 = vcmp.gt.f32.partialorder %v633, 0.0
    %vm650 = vcmp.gt.f32.partialorder %v634, 0.0
    %vm651 = vcmp.gt.f32.partialorder %v635, 0.0
    %vm652 = vcmp.gt.f32.partialorder %v636, 0.0
    %vm653 = vcmp.gt.f32.partialorder %v637, 0.0
    %vm654 = vcmp.gt.f32.partialorder %v638, 0.0
    %vm655 = vcmp.gt.f32.partialorder %v639, 0.0
    %vm656 = vcmp.gt.f32.partialorder %v640, 0.0
    %vm657 = vcmp.gt.f32.partialorder %v641, 0.0
    %vm658 = vcmp.gt.f32.partialorder %v642, 0.0
    %vm659 = vcmp.gt.f32.partialorder %v643, 0.0
    %vm660 = vcmp.gt.f32.partialorder %v644, 0.0
    %v661 = vld [vmem:[%s6] sm:$0x1]
    %vm662 = vcmp.gt.f32.partialorder %v661, 0.0
    %v663 = vsel %vm645, 1, 0
    %v664 = vsel %vm646, 1, 0
    %v665 = vsel %vm647, 1, 0
    %v666 = vsel %vm648, 1, 0
    %v667 = vsel %vm649, 1, 0
    %v668 = vsel %vm650, 1, 0
    %v669 = vsel %vm651, 1, 0
    %v670 = vsel %vm652, 1, 0
    %v671 = vsel %vm653, 1, 0
    %v672 = vsel %vm654, 1, 0
    %v673 = vsel %vm655, 1, 0
    %v674 = vsel %vm656, 1, 0
    %v675 = vsel %vm657, 1, 0
    %v676 = vsel %vm658, 1, 0
    %v677 = vsel %vm659, 1, 0
    %v678 = vsel %vm660, 1, 0
    %679 = vset.pattern.permute.xlu0 0
    %680 = vperm.xlu0 %679, %v663
    %v681 = vpop.permute.xlu0 %680
    %682 = vset.pattern.permute.xlu0 0
    %683 = vperm.xlu0 %682, %v664
    %v684 = vpop.permute.xlu0 %683
    %685 = vset.pattern.permute.xlu0 0
    %686 = vperm.xlu0 %685, %v665
    %v687 = vpop.permute.xlu0 %686
    %688 = vset.pattern.permute.xlu0 0
    %689 = vperm.xlu0 %688, %v666
    %v690 = vpop.permute.xlu0 %689
    %691 = vset.pattern.permute.xlu0 0
    %692 = vperm.xlu0 %691, %v667
    %v693 = vpop.permute.xlu0 %692
    %694 = vset.pattern.permute.xlu0 0
    %695 = vperm.xlu0 %694, %v668
    %v696 = vpop.permute.xlu0 %695
    %697 = vset.pattern.permute.xlu0 0
    %698 = vperm.xlu0 %697, %v669
    %v699 = vpop.permute.xlu0 %698
    %700 = vset.pattern.permute.xlu0 0
    %701 = vperm.xlu0 %700, %v670
    %v702 = vpop.permute.xlu0 %701
    %703 = vset.pattern.permute.xlu0 0
    %704 = vperm.xlu0 %703, %v671
    %v705 = vpop.permute.xlu0 %704
    %706 = vset.pattern.permute.xlu0 0
    %707 = vperm.xlu0 %706, %v672
    %v708 = vpop.permute.xlu0 %707
    %709 = vset.pattern.permute.xlu0 0
    %710 = vperm.xlu0 %709, %v673
    %v711 = vpop.permute.xlu0 %710
    %712 = vset.pattern.permute.xlu0 0
    %713 = vperm.xlu0 %712, %v674
    %v714 = vpop.permute.xlu0 %713
    %715 = vset.pattern.permute.xlu0 0
    %716 = vperm.xlu0 %715, %v675
    %v717 = vpop.permute.xlu0 %716
    %718 = vset.pattern.permute.xlu0 0
    %719 = vperm.xlu0 %718, %v676
    %v720 = vpop.permute.xlu0 %719
    %721 = vset.pattern.permute.xlu0 0
    %722 = vperm.xlu0 %721, %v677
    %v723 = vpop.permute.xlu0 %722
    %724 = vset.pattern.permute.xlu0 0
    %725 = vperm.xlu0 %724, %v678
    %v726 = vpop.permute.xlu0 %725
    %vm727 = vcmp.eq.s32.totalorder %v681, 1
    %vm728 = vcmp.eq.s32.totalorder %v684, 1
    %vm729 = vcmp.eq.s32.totalorder %v687, 1
    %vm730 = vcmp.eq.s32.totalorder %v690, 1
    %vm731 = vcmp.eq.s32.totalorder %v693, 1
    %vm732 = vcmp.eq.s32.totalorder %v696, 1
    %vm733 = vcmp.eq.s32.totalorder %v699, 1
    %vm734 = vcmp.eq.s32.totalorder %v702, 1
    %vm735 = vcmp.eq.s32.totalorder %v705, 1
    %vm736 = vcmp.eq.s32.totalorder %v708, 1
    %vm737 = vcmp.eq.s32.totalorder %v711, 1
    %vm738 = vcmp.eq.s32.totalorder %v714, 1
    %vm739 = vcmp.eq.s32.totalorder %v717, 1
    %vm740 = vcmp.eq.s32.totalorder %v720, 1
    %vm741 = vcmp.eq.s32.totalorder %v723, 1
    %vm742 = vcmp.eq.s32.totalorder %v726, 1
    %v743 = vsel %vm662, 1, 0
    %v744 = vlaneseq
    %v745 = vshrl.u32 %v744, 7
    %v746 = vsub.s32 0, %v745
    %v747 = vrot.slane %v743, %v746
    %vm748 = vcmp.eq.s32.totalorder %v747, 1
    %vm749 = vmand %vm727, %vm748
    %vm750 = vmand %vm728, %vm748
    %vm751 = vmand %vm729, %vm748
    %vm752 = vmand %vm730, %vm748
    %vm753 = vmand %vm731, %vm748
    %vm754 = vmand %vm732, %vm748
    %vm755 = vmand %vm733, %vm748
    %vm756 = vmand %vm734, %vm748
    %vm757 = vmand %vm735, %vm748
    %vm758 = vmand %vm736, %vm748
    %vm759 = vmand %vm737, %vm748
    %vm760 = vmand %vm738, %vm748
    %vm761 = vmand %vm739, %vm748
    %vm762 = vmand %vm740, %vm748
    %vm763 = vmand %vm741, %vm748
    %vm764 = vmand %vm742, %vm748
    %v765 = vld [vmem:[%s7] sm:$0xff]
    %v766 = vld [vmem:[%s7 + $0x8] sm:$0xff]
    %v767 = vld [vmem:[%s7 + $0x10] sm:$0xff]
    %v768 = vld [vmem:[%s7 + $0x18] sm:$0xff]
    %v769 = vld [vmem:[%s7 + $0x20] sm:$0xff]
    %v770 = vld [vmem:[%s7 + $0x28] sm:$0xff]
    %v771 = vld [vmem:[%s7 + $0x30] sm:$0xff]
    %v772 = vld [vmem:[%s7 + $0x38] sm:$0xff]
    %v773 = vld [vmem:[%s7 + $0x40] sm:$0xff]
    %v774 = vld [vmem:[%s7 + $0x48] sm:$0xff]
    %v775 = vld [vmem:[%s7 + $0x50] sm:$0xff]
    %v776 = vld [vmem:[%s7 + $0x58] sm:$0xff]
    %v777 = vld [vmem:[%s7 + $0x60] sm:$0xff]
    %v778 = vld [vmem:[%s7 + $0x68] sm:$0xff]
    %v779 = vld [vmem:[%s7 + $0x70] sm:$0xff]
    %v780 = vld [vmem:[%s7 + $0x78] sm:$0xff]
    %v781 = vld [vmem:[%s8] sm:$0x1]
    %782 = vset.pattern.permute.xlu0 0
    %783 = vperm.xlu0 %782, %v765
    %v784 = vpop.permute.xlu0 %783
    %785 = vset.pattern.permute.xlu0 0
    %786 = vperm.xlu0 %785, %v766
    %v787 = vpop.permute.xlu0 %786
    %788 = vset.pattern.permute.xlu0 0
    %789 = vperm.xlu0 %788, %v767
    %v790 = vpop.permute.xlu0 %789
    %791 = vset.pattern.permute.xlu0 0
    %792 = vperm.xlu0 %791, %v768
    %v793 = vpop.permute.xlu0 %792
    %794 = vset.pattern.permute.xlu0 0
    %795 = vperm.xlu0 %794, %v769
    %v796 = vpop.permute.xlu0 %795
    %797 = vset.pattern.permute.xlu0 0
    %798 = vperm.xlu0 %797, %v770
    %v799 = vpop.permute.xlu0 %798
    %800 = vset.pattern.permute.xlu0 0
    %801 = vperm.xlu0 %800, %v771
    %v802 = vpop.permute.xlu0 %801
    %803 = vset.pattern.permute.xlu0 0
    %804 = vperm.xlu0 %803, %v772
    %v805 = vpop.permute.xlu0 %804
    %806 = vset.pattern.permute.xlu0 0
    %807 = vperm.xlu0 %806, %v773
    %v808 = vpop.permute.xlu0 %807
    %809 = vset.pattern.permute.xlu0 0
    %810 = vperm.xlu0 %809, %v774
    %v811 = vpop.permute.xlu0 %810
    %812 = vset.pattern.permute.xlu0 0
    %813 = vperm.xlu0 %812, %v775
    %v814 = vpop.permute.xlu0 %813
    %815 = vset.pattern.permute.xlu0 0
    %816 = vperm.xlu0 %815, %v776
    %v817 = vpop.permute.xlu0 %816
    %818 = vset.pattern.permute.xlu0 0
    %819 = vperm.xlu0 %818, %v777
    %v820 = vpop.permute.xlu0 %819
    %821 = vset.pattern.permute.xlu0 0
    %822 = vperm.xlu0 %821, %v778
    %v823 = vpop.permute.xlu0 %822
    %824 = vset.pattern.permute.xlu0 0
    %825 = vperm.xlu0 %824, %v779
    %v826 = vpop.permute.xlu0 %825
    %827 = vset.pattern.permute.xlu0 0
    %828 = vperm.xlu0 %827, %v780
    %v829 = vpop.permute.xlu0 %828
    %v830 = vlaneseq
    %v831 = vshrl.u32 %v830, 7
    %v832 = vsub.s32 0, %v831
    %v833 = vrot.slane %v781, %v832
    %vm834 = vcmp.ne.s32.totalorder %v784, %v833
    %vm835 = vcmp.ne.s32.totalorder %v787, %v833
    %vm836 = vcmp.ne.s32.totalorder %v790, %v833
    %vm837 = vcmp.ne.s32.totalorder %v793, %v833
    %vm838 = vcmp.ne.s32.totalorder %v796, %v833
    %vm839 = vcmp.ne.s32.totalorder %v799, %v833
    %vm840 = vcmp.ne.s32.totalorder %v802, %v833
    %vm841 = vcmp.ne.s32.totalorder %v805, %v833
    %vm842 = vcmp.ne.s32.totalorder %v808, %v833
    %vm843 = vcmp.ne.s32.totalorder %v811, %v833
    %vm844 = vcmp.ne.s32.totalorder %v814, %v833
    %vm845 = vcmp.ne.s32.totalorder %v817, %v833
    %vm846 = vcmp.ne.s32.totalorder %v820, %v833
    %vm847 = vcmp.ne.s32.totalorder %v823, %v833
    %vm848 = vcmp.ne.s32.totalorder %v826, %v833
    %vm849 = vcmp.ne.s32.totalorder %v829, %v833
    %s850 = sld [smem:[#allocation3]]
    %s851 = sld [smem:[#allocation3 + $0x1]]
    %v852 = vstv %s850
    %vm853 = vcmp.lt.f32.partialorder %v613, %v852
    %vm854 = vcmp.lt.f32.partialorder %v614, %v852
    %vm855 = vcmp.lt.f32.partialorder %v615, %v852
    %vm856 = vcmp.lt.f32.partialorder %v616, %v852
    %vm857 = vcmp.lt.f32.partialorder %v617, %v852
    %vm858 = vcmp.lt.f32.partialorder %v618, %v852
    %vm859 = vcmp.lt.f32.partialorder %v619, %v852
    %vm860 = vcmp.lt.f32.partialorder %v620, %v852
    %vm861 = vcmp.lt.f32.partialorder %v621, %v852
    %vm862 = vcmp.lt.f32.partialorder %v622, %v852
    %vm863 = vcmp.lt.f32.partialorder %v623, %v852
    %vm864 = vcmp.lt.f32.partialorder %v624, %v852
    %vm865 = vcmp.lt.f32.partialorder %v625, %v852
    %vm866 = vcmp.lt.f32.partialorder %v626, %v852
    %vm867 = vcmp.lt.f32.partialorder %v627, %v852
    %vm868 = vcmp.lt.f32.partialorder %v628, %v852
    %vm869 = vmand %vm853, %vm749
    %vm870 = vmand %vm854, %vm750
    %vm871 = vmand %vm855, %vm751
    %vm872 = vmand %vm856, %vm752
    %vm873 = vmand %vm857, %vm753
    %vm874 = vmand %vm858, %vm754
    %vm875 = vmand %vm859, %vm755
    %vm876 = vmand %vm860, %vm756
    %vm877 = vmand %vm861, %vm757
    %vm878 = vmand %vm862, %vm758
    %vm879 = vmand %vm863, %vm759
    %vm880 = vmand %vm864, %vm760
    %vm881 = vmand %vm865, %vm761
    %vm882 = vmand %vm866, %vm762
    %vm883 = vmand %vm867, %vm763
    %vm884 = vmand %vm868, %vm764
    %vm885 = vmand %vm869, %vm834
    %vm886 = vmand %vm870, %vm835
    %vm887 = vmand %vm871, %vm836
    %vm888 = vmand %vm872, %vm837
    %vm889 = vmand %vm873, %vm838
    %vm890 = vmand %vm874, %vm839
    %vm891 = vmand %vm875, %vm840
    %vm892 = vmand %vm876, %vm841
    %vm893 = vmand %vm877, %vm842
    %vm894 = vmand %vm878, %vm843
    %vm895 = vmand %vm879, %vm844
    %vm896 = vmand %vm880, %vm845
    %vm897 = vmand %vm881, %vm846
    %vm898 = vmand %vm882, %vm847
    %vm899 = vmand %vm883, %vm848
    %vm900 = vmand %vm884, %vm849
    %v901 = vsel %vm885, 1, 0
    %v902 = vsel %vm886, 1, 0
    %v903 = vsel %vm887, 1, 0
    %v904 = vsel %vm888, 1, 0
    %v905 = vsel %vm889, 1, 0
    %v906 = vsel %vm890, 1, 0
    %v907 = vsel %vm891, 1, 0
    %v908 = vsel %vm892, 1, 0
    %v909 = vsel %vm893, 1, 0
    %v910 = vsel %vm894, 1, 0
    %v911 = vsel %vm895, 1, 0
    %v912 = vsel %vm896, 1, 0
    %v913 = vsel %vm897, 1, 0
    %v914 = vsel %vm898, 1, 0
    %v915 = vsel %vm899, 1, 0
    %v916 = vsel %vm900, 1, 0
    %v917 = vcvt.s32.f32 %v901
    %v918 = vcvt.s32.f32 %v902
    %v919 = vcvt.s32.f32 %v903
    %v920 = vcvt.s32.f32 %v904
    %v921 = vcvt.s32.f32 %v905
    %v922 = vcvt.s32.f32 %v906
    %v923 = vcvt.s32.f32 %v907
    %v924 = vcvt.s32.f32 %v908
    %v925 = vcvt.s32.f32 %v909
    %v926 = vcvt.s32.f32 %v910
    %v927 = vcvt.s32.f32 %v911
    %v928 = vcvt.s32.f32 %v912
    %v929 = vcvt.s32.f32 %v913
    %v930 = vcvt.s32.f32 %v914
    %v931 = vcvt.s32.f32 %v915
    %v932 = vcvt.s32.f32 %v916
    %v933 = vstv %s851
    %vm934 = vcmp.gt.f32.partialorder %v613, %v933
    %vm935 = vcmp.gt.f32.partialorder %v614, %v933
    %vm936 = vcmp.gt.f32.partialorder %v615, %v933
    %vm937 = vcmp.gt.f32.partialorder %v616, %v933
    %vm938 = vcmp.gt.f32.partialorder %v617, %v933
    %vm939 = vcmp.gt.f32.partialorder %v618, %v933
    %vm940 = vcmp.gt.f32.partialorder %v619, %v933
    %vm941 = vcmp.gt.f32.partialorder %v620, %v933
    %vm942 = vcmp.gt.f32.partialorder %v621, %v933
    %vm943 = vcmp.gt.f32.partialorder %v622, %v933
    %vm944 = vcmp.gt.f32.partialorder %v623, %v933
    %vm945 = vcmp.gt.f32.partialorder %v624, %v933
    %vm946 = vcmp.gt.f32.partialorder %v625, %v933
    %vm947 = vcmp.gt.f32.partialorder %v626, %v933
    %vm948 = vcmp.gt.f32.partialorder %v627, %v933
    %vm949 = vcmp.gt.f32.partialorder %v628, %v933
    %v950 = vsel %vm934, 1, 0
    %v951 = vsel %vm935, 1, 0
    %v952 = vsel %vm936, 1, 0
    %v953 = vsel %vm937, 1, 0
    %v954 = vsel %vm938, 1, 0
    %v955 = vsel %vm939, 1, 0
    %v956 = vsel %vm940, 1, 0
    %v957 = vsel %vm941, 1, 0
    %v958 = vsel %vm942, 1, 0
    %v959 = vsel %vm943, 1, 0
    %v960 = vsel %vm944, 1, 0
    %v961 = vsel %vm945, 1, 0
    %v962 = vsel %vm946, 1, 0
    %v963 = vsel %vm947, 1, 0
    %v964 = vsel %vm948, 1, 0
    %v965 = vsel %vm949, 1, 0
    %v966 = vcvt.s32.f32 %v950
    %v967 = vcvt.s32.f32 %v951
    %v968 = vcvt.s32.f32 %v952
    %v969 = vcvt.s32.f32 %v953
    %v970 = vcvt.s32.f32 %v954
    %v971 = vcvt.s32.f32 %v955
    %v972 = vcvt.s32.f32 %v956
    %v973 = vcvt.s32.f32 %v957
    %v974 = vcvt.s32.f32 %v958
    %v975 = vcvt.s32.f32 %v959
    %v976 = vcvt.s32.f32 %v960
    %v977 = vcvt.s32.f32 %v961
    %v978 = vcvt.s32.f32 %v962
    %v979 = vcvt.s32.f32 %v963
    %v980 = vcvt.s32.f32 %v964
    %v981 = vcvt.s32.f32 %v965
    %v982 = vsub.f32 1.0, %v388
    %v983 = vsub.f32 1.0, %v395
    %v984 = vsub.f32 1.0, %v402
    %v985 = vsub.f32 1.0, %v409
    %v986 = vsub.f32 1.0, %v416
    %v987 = vsub.f32 1.0, %v423
    %v988 = vsub.f32 1.0, %v430
    %v989 = vsub.f32 1.0, %v437
    %v990 = vsub.f32 1.0, %v444
    %v991 = vsub.f32 1.0, %v451
    %v992 = vsub.f32 1.0, %v458
    %v993 = vsub.f32 1.0, %v465
    %v994 = vsub.f32 1.0, %v472
    %v995 = vsub.f32 1.0, %v479
    %v996 = vsub.f32 1.0, %v486
    %v997 = vsub.f32 1.0, %v493
    %v998 = vmax.f32 %v982, 0.0
    %v999 = vmax.f32 %v983, 0.0
    %v1000 = vmax.f32 %v984, 0.0
    %v1001 = vmax.f32 %v985, 0.0
    %v1002 = vmax.f32 %v986, 0.0
    %v1003 = vmax.f32 %v987, 0.0
    %v1004 = vmax.f32 %v988, 0.0
    %v1005 = vmax.f32 %v989, 0.0
    %v1006 = vmax.f32 %v990, 0.0
    %v1007 = vmax.f32 %v991, 0.0
    %v1008 = vmax.f32 %v992, 0.0
    %v1009 = vmax.f32 %v993, 0.0
    %v1010 = vmax.f32 %v994, 0.0
    %v1011 = vmax.f32 %v995, 0.0
    %v1012 = vmax.f32 %v996, 0.0
    %v1013 = vmax.f32 %v997, 0.0
    %s1014 = sld [smem:[#allocation2]]
    %v1015 = vmul.f32 %v388, %v917
    %v1016 = vmul.f32 %v395, %v918
    %v1017 = vmul.f32 %v402, %v919
    %v1018 = vmul.f32 %v409, %v920
    %v1019 = vmul.f32 %v416, %v921
    %v1020 = vmul.f32 %v423, %v922
    %v1021 = vmul.f32 %v430, %v923
    %v1022 = vmul.f32 %v437, %v924
    %v1023 = vmul.f32 %v444, %v925
    %v1024 = vmul.f32 %v451, %v926
    %v1025 = vmul.f32 %v458, %v927
    %v1026 = vmul.f32 %v465, %v928
    %v1027 = vmul.f32 %v472, %v929
    %v1028 = vmul.f32 %v479, %v930
    %v1029 = vmul.f32 %v486, %v931
    %v1030 = vmul.f32 %v493, %v932
    %v1031 = vadd.f32 %v1015, %v1016
    %v1032 = vadd.f32 %v1031, %v1017
    %v1033 = vadd.f32 %v1032, %v1018
    %v1034 = vadd.f32 %v1033, %v1019
    %v1035 = vadd.f32 %v1034, %v1020
    %v1036 = vadd.f32 %v1035, %v1021
    %v1037 = vadd.f32 %v1036, %v1022
    %v1038 = vadd.f32 %v1037, %v1023
    %v1039 = vadd.f32 %v1038, %v1024
    %v1040 = vadd.f32 %v1039, %v1025
    %v1041 = vadd.f32 %v1040, %v1026
    %v1042 = vadd.f32 %v1041, %v1027
    %v1043 = vadd.f32 %v1042, %v1028
    %v1044 = vadd.f32 %v1043, %v1029
    %v1045 = vadd.f32 %v1044, %v1030
    %1046 = vadd.xlane.f32.xlu0 %v1045
    %v1047 = vpop.xlane.xlu0 %1046
    %v1048 = vrot.slane %v1047, 4
    %v1049 = vadd.f32 %v1047, %v1048
    %v1050 = vrot.slane %v1049, 2
    %v1051 = vadd.f32 %v1049, %v1050
    %v1052 = vrot.slane %v1051, 1
    %v1053 = vadd.f32 %v1051, %v1052
    %s1054 = vtos %v1053
    %s1055 = sadd.f32 %s1014, %s1054
    %s1056 = scalar_lea.smem [#allocation2], 0
    %1057 = sst [smem:[%s1056]] %s1055
    %s1058 = sld [smem:[#allocation2 + $0x1]]
    %v1059 = vadd.f32 %v917, %v918
    %v1060 = vadd.f32 %v1059, %v919
    %v1061 = vadd.f32 %v1060, %v920
    %v1062 = vadd.f32 %v1061, %v921
    %v1063 = vadd.f32 %v1062, %v922
    %v1064 = vadd.f32 %v1063, %v923
    %v1065 = vadd.f32 %v1064, %v924
    %v1066 = vadd.f32 %v1065, %v925
    %v1067 = vadd.f32 %v1066, %v926
    %v1068 = vadd.f32 %v1067, %v927
    %v1069 = vadd.f32 %v1068, %v928
    %v1070 = vadd.f32 %v1069, %v929
    %v1071 = vadd.f32 %v1070, %v930
    %v1072 = vadd.f32 %v1071, %v931
    %v1073 = vadd.f32 %v1072, %v932
    %1074 = vadd.xlane.f32.xlu0 %v1073
    %v1075 = vpop.xlane.xlu0 %1074
    %v1076 = vrot.slane %v1075, 4
    %v1077 = vadd.f32 %v1075, %v1076
    %v1078 = vrot.slane %v1077, 2
    %v1079 = vadd.f32 %v1077, %v1078
    %v1080 = vrot.slane %v1079, 1
    %v1081 = vadd.f32 %v1079, %v1080
    %s1082 = vtos %v1081
    %s1083 = sadd.f32 %s1058, %s1082
    %s1084 = scalar_lea.smem [#allocation2], 1
    %1085 = sst [smem:[%s1084]] %s1083
    %s1086 = sld [smem:[#allocation2 + $0x2]]
    %v1087 = vmul.f32 %v998, %v966
    %v1088 = vmul.f32 %v999, %v967
    %v1089 = vmul.f32 %v1000, %v968
    %v1090 = vmul.f32 %v1001, %v969
    %v1091 = vmul.f32 %v1002, %v970
    %v1092 = vmul.f32 %v1003, %v971
    %v1093 = vmul.f32 %v1004, %v972
    %v1094 = vmul.f32 %v1005, %v973
    %v1095 = vmul.f32 %v1006, %v974
    %v1096 = vmul.f32 %v1007, %v975
    %v1097 = vmul.f32 %v1008, %v976
    %v1098 = vmul.f32 %v1009, %v977
    %v1099 = vmul.f32 %v1010, %v978
    %v1100 = vmul.f32 %v1011, %v979
    %v1101 = vmul.f32 %v1012, %v980
    %v1102 = vmul.f32 %v1013, %v981
    %v1103 = vadd.f32 %v1087, %v1088
    %v1104 = vadd.f32 %v1103, %v1089
    %v1105 = vadd.f32 %v1104, %v1090
    %v1106 = vadd.f32 %v1105, %v1091
    %v1107 = vadd.f32 %v1106, %v1092
    %v1108 = vadd.f32 %v1107, %v1093
    %v1109 = vadd.f32 %v1108, %v1094
    %v1110 = vadd.f32 %v1109, %v1095
    %v1111 = vadd.f32 %v1110, %v1096
    %v1112 = vadd.f32 %v1111, %v1097
    %v1113 = vadd.f32 %v1112, %v1098
    %v1114 = vadd.f32 %v1113, %v1099
    %v1115 = vadd.f32 %v1114, %v1100
    %v1116 = vadd.f32 %v1115, %v1101
    %v1117 = vadd.f32 %v1116, %v1102
    %1118 = vadd.xlane.f32.xlu0 %v1117
    %v1119 = vpop.xlane.xlu0 %1118
    %v1120 = vrot.slane %v1119, 4
    %v1121 = vadd.f32 %v1119, %v1120
    %v1122 = vrot.slane %v1121, 2
    %v1123 = vadd.f32 %v1121, %v1122
    %v1124 = vrot.slane %v1123, 1
    %v1125 = vadd.f32 %v1123, %v1124
    %s1126 = vtos %v1125
    %s1127 = sadd.f32 %s1086, %s1126
    %s1128 = scalar_lea.smem [#allocation2], 2
    %1129 = sst [smem:[%s1128]] %s1127
    %s1130 = sld [smem:[#allocation2 + $0x3]]
    %v1131 = vadd.f32 %v966, %v967
    %v1132 = vadd.f32 %v1131, %v968
    %v1133 = vadd.f32 %v1132, %v969
    %v1134 = vadd.f32 %v1133, %v970
    %v1135 = vadd.f32 %v1134, %v971
    %v1136 = vadd.f32 %v1135, %v972
    %v1137 = vadd.f32 %v1136, %v973
    %v1138 = vadd.f32 %v1137, %v974
    %v1139 = vadd.f32 %v1138, %v975
    %v1140 = vadd.f32 %v1139, %v976
    %v1141 = vadd.f32 %v1140, %v977
    %v1142 = vadd.f32 %v1141, %v978
    %v1143 = vadd.f32 %v1142, %v979
    %v1144 = vadd.f32 %v1143, %v980
    %v1145 = vadd.f32 %v1144, %v981
    %1146 = vadd.xlane.f32.xlu0 %v1145
    %v1147 = vpop.xlane.xlu0 %1146
    %v1148 = vrot.slane %v1147, 4
    %v1149 = vadd.f32 %v1147, %v1148
    %v1150 = vrot.slane %v1149, 2
    %v1151 = vadd.f32 %v1149, %v1150
    %v1152 = vrot.slane %v1151, 1
    %v1153 = vadd.f32 %v1151, %v1152
    %s1154 = vtos %v1153
    %s1155 = sadd.f32 %s1130, %s1154
    %s1156 = scalar_lea.smem [#allocation2], 3
    %1157 = sst [smem:[%s1156]] %s1155
    // Predicated region
    $region46: #{tpu_custom_call.1} parent=1 // pred_check
      _
    $region47: #{tpu_custom_call.1} parent=1 // pred_check_branch
      %1159 = sbr.rel (%p48) target = $region49
    $region48: #{tpu_custom_call.1} parent=1 // pred_region
      %s1160 = sld [smem:[#allocation2]]
      %s1161 = sld [smem:[#allocation2 + $0x1]]
      %s1162 = sld [smem:[#allocation2 + $0x2]]
      %s1163 = sld [smem:[#allocation2 + $0x3]]
      %p1164 = scmp.gt.f32.partialorder %s1161, 0.0
      %s1165 = smax.f32 %s1161, 1.0
      %v1166 = vstv %s1165
      %v1167 = vrcp.pop %v1166
      %s1168 = vtos %v1167
      %s1169 = smul.f32 %s1160, %s1168
      %s1170 = scalar_select %p1164, %s1169, 0.0
      %p1171 = scmp.gt.f32.partialorder %s1163, 0.0
      %s1172 = smax.f32 %s1163, 1.0
      %v1173 = vstv %s1172
      %v1174 = vrcp.pop %v1173
      %s1175 = vtos %v1174
      %s1176 = smul.f32 %s1162, %s1175
      %s1177 = scalar_select %p1171, %s1176, 0.0
      %s1178 = sadd.f32 %s1170, %s1177
      %s1179 = scalar_lea.smem [#allocation6], 0
      %1180 = sst [smem:[%s1179]] %s1178
    $region49: #{tpu_custom_call.1} parent=1 // pred_fallthru
      _
    // Predicated region
    $region50: #{tpu_custom_call.1} parent=1 // pred_check
      _
    $region51: #{tpu_custom_call.1} parent=1 // pred_check_branch
      %1182 = sbr.rel (0) target = $region53
    $region52: #{tpu_custom_call.1} parent=1 // pred_region
      %s1184 = ssub.s32 16, 16
      %1185 = vsyncadd [#allocation4], %s1184
      %1188 = dma.smem_to_hbm [#allocation6], 16, %s9, [#allocation4]
    $region53: #{tpu_custom_call.1} parent=1 // pred_fallthru
      _
    // Predicated region
    $region54: #{tpu_custom_call.1} parent=1 // pred_check
      _
    $region55: #{tpu_custom_call.1} parent=1 // pred_check_branch
      %1190 = sbr.rel (0) target = $region57
    $region56: #{tpu_custom_call.1} parent=1 // pred_region
      %1191 = dma.done [#allocation4], 16
    $region57: #{tpu_custom_call.1} parent=1 // pred_fallthru
      _
    %1192 = sfence
    %1193 = vsyncpa [#allocation4], 1
    %1194 = vsyncpa [#allocation5], 1

</llo_original>
